<compile_context>
chip_gen: v7x
topology: tpu7x:2x2x1
jax: 0.10.0
libtpu: 0.0.40
codegen_flags: <defaults>
</compile_context>

<pallas_src>
import jax
import jax.numpy as jnp
from jax import lax
from jax.experimental import pallas as pl
from jax.experimental.pallas import tpu as pltpu


def _round_up(x, m):
    return ((x + m - 1) // m) * m


def _make_embed_kernel(tile_tokens, vocab_size, n_pos_tiles, issue_unroll=8):
    T = tile_tokens
    V = vocab_size

    def _issue_gather(ids_ref, wte_hbm, gather_buf, sems, tile_idx, slot):
        """Issue T row-gather DMAs for tile `tile_idx` into buffer slot `slot`."""
        base = tile_idx * T

        def body(i, carry):
            tok = ids_ref[base + i]
            tok = jnp.minimum(jnp.maximum(tok, 0), V - 1)   # guard OOB ids
            pltpu.make_async_copy(
                wte_hbm.at[pl.ds(tok, 1), :],
                gather_buf.at[slot, pl.ds(i, 1), :],
                sems.at[slot],
            ).start()
            return carry

        # Partially unrolled issue loop keeps the DMA-descriptor slot fed.
        _ = lax.fori_loop(0, T, body, 0, unroll=min(issue_unroll, T))

    def _embed_kernel(ids_ref, wpe_ref, wte_hbm, out_ref, gather_buf, sems):
        # ids_ref:    SMEM (B*S_pad,) int32   (scalar-prefetched token ids)
        # wpe_ref:    VMEM (S_pad, E)         (whole positional table, resident)
        # wte_hbm:    HBM  (V, E)             (token table, stays in HBM)
        # out_ref:    VMEM (T, E)             (output tile)
        # gather_buf: VMEM (2, T, E) scratch  (double-buffered gathered rows)
        # sems:       DMA semaphores (2,)     (one per slot)
        o = pl.program_id(0)
        j = pl.program_id(1)
        n_inner = pl.num_programs(1)
        tile = o * n_inner + j
        slot = j % 2

        # Cold start: first inner step of this (core-local) chunk issues its
        # own gather.
        @pl.when(j == 0)
        def _():
            _issue_gather(ids_ref, wte_hbm, gather_buf, sems, tile, slot)

        # Prefetch the NEXT tile's rows into the other slot BEFORE waiting on
        # the current slot, so its DMAs fly during this step's wait + compute.
        @pl.when(j + 1 < n_inner)
        def _():
            _issue_gather(ids_ref, wte_hbm, gather_buf, sems, tile + 1, 1 - slot)

        # Single size-matched wait for all T row copies of the current slot
        # (DMA sems accumulate bytes; dst sized (T, E) == T row copies).
        pltpu.make_async_copy(
            gather_buf.at[slot], gather_buf.at[slot], sems.at[slot]
        ).wait()

        # Positional rows for this tile, sliced from the resident wpe.
        pos_start = pl.multiple_of((tile % n_pos_tiles) * T, 8)
        out_ref[...] = (
            gather_buf[slot] + wpe_ref[pl.ds(pos_start, T), :]
        ).astype(out_ref.dtype)

    return _embed_kernel


def t0_forward(input_ids, wte, wpe, *, max_tile_tokens=512):
    """Pallas implementation of T0.forward (eval mode: dropout == identity)."""
    B, S = input_ids.shape
    V, E = wte.shape
    assert S <= wpe.shape[0], "seq_len exceeds n_positions"
    dtype = wte.dtype

    # Tile size: multiple of 8 sublanes, at most max_tile_tokens.
    T = max(8, (min(max_tile_tokens, _round_up(S, 8)) // 8) * 8)
    S_pad = _round_up(S, T)              # pad seq so T divides it (tail sliced off)
    n_pos_tiles = S_pad // T
    n_tiles = (B * S_pad) // T
    P = 2 if (n_tiles % 2 == 0 and n_tiles >= 2) else 1   # outer "parallel" split
    n_inner = n_tiles // P

    ids = input_ids.astype(jnp.int32)
    if S_pad != S:
        ids = jnp.pad(ids, ((0, 0), (0, S_pad - S)))       # pad tokens -> id 0
    ids_flat = ids.reshape(B * S_pad)

    wpe_s = wpe[:S].astype(dtype)                          # only first S rows used
    if S_pad != S:
        wpe_s = jnp.pad(wpe_s, ((0, S_pad - S), (0, 0)))   # pad positions -> 0

    kernel = _make_embed_kernel(T, V, n_pos_tiles)

    grid_spec = pltpu.PrefetchScalarGridSpec(
        num_scalar_prefetch=1,                 # ids -> SMEM
        grid=(P, n_inner),
        in_specs=[
            # Whole positional table resident in VMEM, fetched exactly once.
            pl.BlockSpec((S_pad, E), lambda o, j, ids: (0, 0)),
            # Token table stays in HBM; rows DMA-gathered inside the kernel.
            pl.BlockSpec(memory_space=pl.ANY),
        ],
        out_specs=pl.BlockSpec((T, E), lambda o, j, ids: (o * n_inner + j, 0)),
        scratch_shapes=[
            pltpu.VMEM((2, T, E), dtype),      # double-buffered gather target
            pltpu.SemaphoreType.DMA((2,)),     # one DMA sem per slot
        ],
    )

    out_flat = pl.pallas_call(
        kernel,
        out_shape=jax.ShapeDtypeStruct((B * S_pad, E), dtype),
        grid_spec=grid_spec,
        compiler_params=pltpu.CompilerParams(
            # Outer axis splits across TensorCores (v7x); inner axis carries the
            # cross-step prefetch and must stay sequential.
            dimension_semantics=("parallel", "arbitrary"),
            vmem_limit_bytes=64 * 1024 * 1024,
        ),
    )(ids_flat, wpe_s, wte)

    out = out_flat.reshape(B, S_pad, E)
    if S_pad != S:
        out = out[:, :S, :]
    # nn.Dropout is identity in eval/inference mode.
    # TODO(synk): train-mode dropout (embd_pdrop) not applied; would need
    # pltpu.prng_seed / pltpu.prng_random_bits per tile.
    return out


if __name__ == "__main__":
    key = jax.random.PRNGKey(0)
    k_ids, k_wte, k_wpe, k_ids2 = jax.random.split(key, 4)

    # Small GPT-2-like config (E multiple of 128 -> lane-dense stores).
    vocab_size, n_positions, n_embd = 64, 32, 128
    B, S = 2, 32

    # Deterministic parameter init (GPT-2 uses N(0, 0.02) for embeddings).
    wte = (0.02 * jax.random.normal(k_wte, (vocab_size, n_embd))).astype(jnp.float32)
    wpe = (0.02 * jax.random.normal(k_wpe, (n_positions, n_embd))).astype(jnp.float32)

    # Case 1: several tiles per core chunk -> exercises the cross-step
    # double-buffered prefetch and resident-wpe slicing.
    input_ids = jax.random.randint(k_ids, (B, S), 0, vocab_size, dtype=jnp.int32)
    out = jax.block_until_ready(t0_forward(input_ids, wte, wpe, max_tile_tokens=8))
    ref = jnp.take(wte, input_ids, axis=0) + wpe[:S][None, :, :]
    assert out.shape == (B, S, n_embd), out.shape
    assert jnp.allclose(out, ref, atol=1e-6), "mismatch vs reference (case 1)"

    # Case 2: seq length not a multiple of 8 -> exercises the padding path
    # that fixes the old _pick_tile_tokens sublane-legality bug.
    S2 = 10
    input_ids2 = jax.random.randint(k_ids2, (B, S2), 0, vocab_size, dtype=jnp.int32)
    out2 = jax.block_until_ready(t0_forward(input_ids2, wte, wpe))
    ref2 = jnp.take(wte, input_ids2, axis=0) + wpe[:S2][None, :, :]
    assert out2.shape == (B, S2, n_embd), out2.shape
    assert jnp.allclose(out2, ref2, atol=1e-6), "mismatch vs reference (case 2)"

    print("KERNEL_OK")
</pallas_src>

<mosaic_0001>
module attributes {stable_mosaic.version = 11 : i64} {
  func.func @_embed_kernel(%arg0: i32, %arg1: i32, %arg2: memref<64xi32, #tpu.memory_space<smem>>, %arg3: memref<32x128xf32, #tpu.memory_space<vmem>>, %arg4: memref<64x128xf32, #tpu.memory_space<any>>, %arg5: memref<8x128xf32, #tpu.memory_space<vmem>>, %arg6: memref<2x8x128xf32, #tpu.memory_space<vmem>>, %arg7: memref<2x!tpu.dma_semaphore, #tpu.memory_space<semaphore_mem>>) attributes {dimension_semantics = [#tpu.dimension_semantics<parallel>, #tpu.dimension_semantics<arbitrary>], iteration_bounds = array<i64: 2, 4>, scalar_prefetch = 1 : i64, scratch_operands = 2 : i64, tpu.core_type = #tpu.core_type<tc>, window_params = [{pipeline_mode = #tpu.pipeline_mode<synchronous>, transform_indices = @transform_0, window_bounds = array<i64: 32, 128>}, {}, {transform_indices = @transform_2, window_bounds = array<i64: 8, 128>}]} {
    %c4_i32 = arith.constant 4 : i32
    %0 = arith.muli %arg0, %c4_i32 : i32
    %1 = arith.addi %0, %arg1 : i32
    %c2_i32 = arith.constant 2 : i32
    %c0_i32 = arith.constant 0 : i32
    %2 = arith.cmpi eq, %c2_i32, %c0_i32 : i32
    %c1_i32 = arith.constant 1 : i32
    %3 = arith.select %2, %c1_i32, %c2_i32 : i32
    %4 = arith.remsi %arg1, %3 : i32
    %c0_i32_0 = arith.constant 0 : i32
    %5 = arith.cmpi ne, %4, %c0_i32_0 : i32
    %c0_i32_1 = arith.constant 0 : i32
    %6 = arith.cmpi slt, %4, %c0_i32_1 : i32
    %c0_i32_2 = arith.constant 0 : i32
    %7 = arith.cmpi slt, %3, %c0_i32_2 : i32
    %8 = arith.xori %6, %7 : i1
    %9 = arith.andi %8, %5 : i1
    %10 = arith.addi %4, %3 : i32
    %11 = arith.select %9, %10, %4 : i32
    %c0_i32_3 = arith.constant 0 : i32
    %12 = arith.cmpi eq, %arg1, %c0_i32_3 : i32
    %13 = arith.extui %12 : i1 to i32
    %c0_i32_4 = arith.constant 0 : i32
    %14 = arith.cmpi ne, %13, %c0_i32_4 : i32
    scf.if %14 {
      %c8_i32_22 = arith.constant 8 : i32
      %44 = arith.muli %1, %c8_i32_22 : i32
      %c0_i32_23 = arith.constant 0 : i32
      %45 = arith.addi %44, %c0_i32_23 : i32
      %46 = arith.index_cast %45 : i32 to index
      %47 = memref.load %arg2[%46] : memref<64xi32, #tpu.memory_space<smem>>
      %c0_i32_24 = arith.constant 0 : i32
      %48 = arith.maxsi %47, %c0_i32_24 : i32
      %c63_i32 = arith.constant 63 : i32
      %49 = arith.minsi %48, %c63_i32 : i32
      %c0_i32_25 = arith.constant 0 : i32
      %50 = tpu.memref_slice %arg4[%49, %c0_i32_25] : memref<64x128xf32, #tpu.memory_space<any>> -> memref<1x128xf32, #tpu.memory_space<any>>
      %c0_i32_26 = arith.constant 0 : i32
      %51 = tpu.memref_slice %arg6[%11, %c0_i32_23, %c0_i32_26] : memref<2x8x128xf32, #tpu.memory_space<vmem>> -> memref<1x1x128xf32, #tpu.memory_space<vmem>>
      %52 = tpu.memref_squeeze %51 : memref<1x1x128xf32, #tpu.memory_space<vmem>> -> memref<1x128xf32, #tpu.memory_space<vmem>>
      %53 = tpu.memref_slice %arg7[%11] : memref<2x!tpu.dma_semaphore, #tpu.memory_space<semaphore_mem>> -> memref<1x!tpu.dma_semaphore, #tpu.memory_space<semaphore_mem>>
      %54 = tpu.memref_squeeze %53 : memref<1x!tpu.dma_semaphore, #tpu.memory_space<semaphore_mem>> -> memref<!tpu.dma_semaphore, #tpu.memory_space<semaphore_mem>>
      tpu.enqueue_dma source(%50 : memref<1x128xf32, #tpu.memory_space<any>>) target(%52 : memref<1x128xf32, #tpu.memory_space<vmem>>) target_semaphore(%54 : memref<!tpu.dma_semaphore, #tpu.memory_space<semaphore_mem>>)
      %c1_i32_27 = arith.constant 1 : i32
      %55 = arith.addi %44, %c1_i32_27 : i32
      %56 = arith.index_cast %55 : i32 to index
      %57 = memref.load %arg2[%56] : memref<64xi32, #tpu.memory_space<smem>>
      %c0_i32_28 = arith.constant 0 : i32
      %58 = arith.maxsi %57, %c0_i32_28 : i32
      %c63_i32_29 = arith.constant 63 : i32
      %59 = arith.minsi %58, %c63_i32_29 : i32
      %c0_i32_30 = arith.constant 0 : i32
      %60 = tpu.memref_slice %arg4[%59, %c0_i32_30] : memref<64x128xf32, #tpu.memory_space<any>> -> memref<1x128xf32, #tpu.memory_space<any>>
      %c0_i32_31 = arith.constant 0 : i32
      %61 = tpu.memref_slice %arg6[%11, %c1_i32_27, %c0_i32_31] : memref<2x8x128xf32, #tpu.memory_space<vmem>> -> memref<1x1x128xf32, #tpu.memory_space<vmem>>
      %62 = tpu.memref_squeeze %61 : memref<1x1x128xf32, #tpu.memory_space<vmem>> -> memref<1x128xf32, #tpu.memory_space<vmem>>
      %63 = tpu.memref_slice %arg7[%11] : memref<2x!tpu.dma_semaphore, #tpu.memory_space<semaphore_mem>> -> memref<1x!tpu.dma_semaphore, #tpu.memory_space<semaphore_mem>>
      %64 = tpu.memref_squeeze %63 : memref<1x!tpu.dma_semaphore, #tpu.memory_space<semaphore_mem>> -> memref<!tpu.dma_semaphore, #tpu.memory_space<semaphore_mem>>
      tpu.enqueue_dma source(%60 : memref<1x128xf32, #tpu.memory_space<any>>) target(%62 : memref<1x128xf32, #tpu.memory_space<vmem>>) target_semaphore(%64 : memref<!tpu.dma_semaphore, #tpu.memory_space<semaphore_mem>>)
      %c2_i32_32 = arith.constant 2 : i32
      %65 = arith.addi %44, %c2_i32_32 : i32
      %66 = arith.index_cast %65 : i32 to index
      %67 = memref.load %arg2[%66] : memref<64xi32, #tpu.memory_space<smem>>
      %c0_i32_33 = arith.constant 0 : i32
      %68 = arith.maxsi %67, %c0_i32_33 : i32
      %c63_i32_34 = arith.constant 63 : i32
      %69 = arith.minsi %68, %c63_i32_34 : i32
      %c0_i32_35 = arith.constant 0 : i32
      %70 = tpu.memref_slice %arg4[%69, %c0_i32_35] : memref<64x128xf32, #tpu.memory_space<any>> -> memref<1x128xf32, #tpu.memory_space<any>>
      %c0_i32_36 = arith.constant 0 : i32
      %71 = tpu.memref_slice %arg6[%11, %c2_i32_32, %c0_i32_36] : memref<2x8x128xf32, #tpu.memory_space<vmem>> -> memref<1x1x128xf32, #tpu.memory_space<vmem>>
      %72 = tpu.memref_squeeze %71 : memref<1x1x128xf32, #tpu.memory_space<vmem>> -> memref<1x128xf32, #tpu.memory_space<vmem>>
      %73 = tpu.memref_slice %arg7[%11] : memref<2x!tpu.dma_semaphore, #tpu.memory_space<semaphore_mem>> -> memref<1x!tpu.dma_semaphore, #tpu.memory_space<semaphore_mem>>
      %74 = tpu.memref_squeeze %73 : memref<1x!tpu.dma_semaphore, #tpu.memory_space<semaphore_mem>> -> memref<!tpu.dma_semaphore, #tpu.memory_space<semaphore_mem>>
      tpu.enqueue_dma source(%70 : memref<1x128xf32, #tpu.memory_space<any>>) target(%72 : memref<1x128xf32, #tpu.memory_space<vmem>>) target_semaphore(%74 : memref<!tpu.dma_semaphore, #tpu.memory_space<semaphore_mem>>)
      %c3_i32 = arith.constant 3 : i32
      %75 = arith.addi %44, %c3_i32 : i32
      %76 = arith.index_cast %75 : i32 to index
      %77 = memref.load %arg2[%76] : memref<64xi32, #tpu.memory_space<smem>>
      %c0_i32_37 = arith.constant 0 : i32
      %78 = arith.maxsi %77, %c0_i32_37 : i32
      %c63_i32_38 = arith.constant 63 : i32
      %79 = arith.minsi %78, %c63_i32_38 : i32
      %c0_i32_39 = arith.constant 0 : i32
      %80 = tpu.memref_slice %arg4[%79, %c0_i32_39] : memref<64x128xf32, #tpu.memory_space<any>> -> memref<1x128xf32, #tpu.memory_space<any>>
      %c0_i32_40 = arith.constant 0 : i32
      %81 = tpu.memref_slice %arg6[%11, %c3_i32, %c0_i32_40] : memref<2x8x128xf32, #tpu.memory_space<vmem>> -> memref<1x1x128xf32, #tpu.memory_space<vmem>>
      %82 = tpu.memref_squeeze %81 : memref<1x1x128xf32, #tpu.memory_space<vmem>> -> memref<1x128xf32, #tpu.memory_space<vmem>>
      %83 = tpu.memref_slice %arg7[%11] : memref<2x!tpu.dma_semaphore, #tpu.memory_space<semaphore_mem>> -> memref<1x!tpu.dma_semaphore, #tpu.memory_space<semaphore_mem>>
      %84 = tpu.memref_squeeze %83 : memref<1x!tpu.dma_semaphore, #tpu.memory_space<semaphore_mem>> -> memref<!tpu.dma_semaphore, #tpu.memory_space<semaphore_mem>>
      tpu.enqueue_dma source(%80 : memref<1x128xf32, #tpu.memory_space<any>>) target(%82 : memref<1x128xf32, #tpu.memory_space<vmem>>) target_semaphore(%84 : memref<!tpu.dma_semaphore, #tpu.memory_space<semaphore_mem>>)
      %c4_i32_41 = arith.constant 4 : i32
      %85 = arith.addi %44, %c4_i32_41 : i32
      %86 = arith.index_cast %85 : i32 to index
      %87 = memref.load %arg2[%86] : memref<64xi32, #tpu.memory_space<smem>>
      %c0_i32_42 = arith.constant 0 : i32
      %88 = arith.maxsi %87, %c0_i32_42 : i32
      %c63_i32_43 = arith.constant 63 : i32
      %89 = arith.minsi %88, %c63_i32_43 : i32
      %c0_i32_44 = arith.constant 0 : i32
      %90 = tpu.memref_slice %arg4[%89, %c0_i32_44] : memref<64x128xf32, #tpu.memory_space<any>> -> memref<1x128xf32, #tpu.memory_space<any>>
      %c0_i32_45 = arith.constant 0 : i32
      %91 = tpu.memref_slice %arg6[%11, %c4_i32_41, %c0_i32_45] : memref<2x8x128xf32, #tpu.memory_space<vmem>> -> memref<1x1x128xf32, #tpu.memory_space<vmem>>
      %92 = tpu.memref_squeeze %91 : memref<1x1x128xf32, #tpu.memory_space<vmem>> -> memref<1x128xf32, #tpu.memory_space<vmem>>
      %93 = tpu.memref_slice %arg7[%11] : memref<2x!tpu.dma_semaphore, #tpu.memory_space<semaphore_mem>> -> memref<1x!tpu.dma_semaphore, #tpu.memory_space<semaphore_mem>>
      %94 = tpu.memref_squeeze %93 : memref<1x!tpu.dma_semaphore, #tpu.memory_space<semaphore_mem>> -> memref<!tpu.dma_semaphore, #tpu.memory_space<semaphore_mem>>
      tpu.enqueue_dma source(%90 : memref<1x128xf32, #tpu.memory_space<any>>) target(%92 : memref<1x128xf32, #tpu.memory_space<vmem>>) target_semaphore(%94 : memref<!tpu.dma_semaphore, #tpu.memory_space<semaphore_mem>>)
      %c5_i32 = arith.constant 5 : i32
      %95 = arith.addi %44, %c5_i32 : i32
      %96 = arith.index_cast %95 : i32 to index
      %97 = memref.load %arg2[%96] : memref<64xi32, #tpu.memory_space<smem>>
      %c0_i32_46 = arith.constant 0 : i32
      %98 = arith.maxsi %97, %c0_i32_46 : i32
      %c63_i32_47 = arith.constant 63 : i32
      %99 = arith.minsi %98, %c63_i32_47 : i32
      %c0_i32_48 = arith.constant 0 : i32
      %100 = tpu.memref_slice %arg4[%99, %c0_i32_48] : memref<64x128xf32, #tpu.memory_space<any>> -> memref<1x128xf32, #tpu.memory_space<any>>
      %c0_i32_49 = arith.constant 0 : i32
      %101 = tpu.memref_slice %arg6[%11, %c5_i32, %c0_i32_49] : memref<2x8x128xf32, #tpu.memory_space<vmem>> -> memref<1x1x128xf32, #tpu.memory_space<vmem>>
      %102 = tpu.memref_squeeze %101 : memref<1x1x128xf32, #tpu.memory_space<vmem>> -> memref<1x128xf32, #tpu.memory_space<vmem>>
      %103 = tpu.memref_slice %arg7[%11] : memref<2x!tpu.dma_semaphore, #tpu.memory_space<semaphore_mem>> -> memref<1x!tpu.dma_semaphore, #tpu.memory_space<semaphore_mem>>
      %104 = tpu.memref_squeeze %103 : memref<1x!tpu.dma_semaphore, #tpu.memory_space<semaphore_mem>> -> memref<!tpu.dma_semaphore, #tpu.memory_space<semaphore_mem>>
      tpu.enqueue_dma source(%100 : memref<1x128xf32, #tpu.memory_space<any>>) target(%102 : memref<1x128xf32, #tpu.memory_space<vmem>>) target_semaphore(%104 : memref<!tpu.dma_semaphore, #tpu.memory_space<semaphore_mem>>)
      %c6_i32 = arith.constant 6 : i32
      %105 = arith.addi %44, %c6_i32 : i32
      %106 = arith.index_cast %105 : i32 to index
      %107 = memref.load %arg2[%106] : memref<64xi32, #tpu.memory_space<smem>>
      %c0_i32_50 = arith.constant 0 : i32
      %108 = arith.maxsi %107, %c0_i32_50 : i32
      %c63_i32_51 = arith.constant 63 : i32
      %109 = arith.minsi %108, %c63_i32_51 : i32
      %c0_i32_52 = arith.constant 0 : i32
      %110 = tpu.memref_slice %arg4[%109, %c0_i32_52] : memref<64x128xf32, #tpu.memory_space<any>> -> memref<1x128xf32, #tpu.memory_space<any>>
      %c0_i32_53 = arith.constant 0 : i32
      %111 = tpu.memref_slice %arg6[%11, %c6_i32, %c0_i32_53] : memref<2x8x128xf32, #tpu.memory_space<vmem>> -> memref<1x1x128xf32, #tpu.memory_space<vmem>>
      %112 = tpu.memref_squeeze %111 : memref<1x1x128xf32, #tpu.memory_space<vmem>> -> memref<1x128xf32, #tpu.memory_space<vmem>>
      %113 = tpu.memref_slice %arg7[%11] : memref<2x!tpu.dma_semaphore, #tpu.memory_space<semaphore_mem>> -> memref<1x!tpu.dma_semaphore, #tpu.memory_space<semaphore_mem>>
      %114 = tpu.memref_squeeze %113 : memref<1x!tpu.dma_semaphore, #tpu.memory_space<semaphore_mem>> -> memref<!tpu.dma_semaphore, #tpu.memory_space<semaphore_mem>>
      tpu.enqueue_dma source(%110 : memref<1x128xf32, #tpu.memory_space<any>>) target(%112 : memref<1x128xf32, #tpu.memory_space<vmem>>) target_semaphore(%114 : memref<!tpu.dma_semaphore, #tpu.memory_space<semaphore_mem>>)
      %c7_i32 = arith.constant 7 : i32
      %115 = arith.addi %44, %c7_i32 : i32
      %116 = arith.index_cast %115 : i32 to index
      %117 = memref.load %arg2[%116] : memref<64xi32, #tpu.memory_space<smem>>
      %c0_i32_54 = arith.constant 0 : i32
      %118 = arith.maxsi %117, %c0_i32_54 : i32
      %c63_i32_55 = arith.constant 63 : i32
      %119 = arith.minsi %118, %c63_i32_55 : i32
      %c0_i32_56 = arith.constant 0 : i32
      %120 = tpu.memref_slice %arg4[%119, %c0_i32_56] : memref<64x128xf32, #tpu.memory_space<any>> -> memref<1x128xf32, #tpu.memory_space<any>>
      %c0_i32_57 = arith.constant 0 : i32
      %121 = tpu.memref_slice %arg6[%11, %c7_i32, %c0_i32_57] : memref<2x8x128xf32, #tpu.memory_space<vmem>> -> memref<1x1x128xf32, #tpu.memory_space<vmem>>
      %122 = tpu.memref_squeeze %121 : memref<1x1x128xf32, #tpu.memory_space<vmem>> -> memref<1x128xf32, #tpu.memory_space<vmem>>
      %123 = tpu.memref_slice %arg7[%11] : memref<2x!tpu.dma_semaphore, #tpu.memory_space<semaphore_mem>> -> memref<1x!tpu.dma_semaphore, #tpu.memory_space<semaphore_mem>>
      %124 = tpu.memref_squeeze %123 : memref<1x!tpu.dma_semaphore, #tpu.memory_space<semaphore_mem>> -> memref<!tpu.dma_semaphore, #tpu.memory_space<semaphore_mem>>
      tpu.enqueue_dma source(%120 : memref<1x128xf32, #tpu.memory_space<any>>) target(%122 : memref<1x128xf32, #tpu.memory_space<vmem>>) target_semaphore(%124 : memref<!tpu.dma_semaphore, #tpu.memory_space<semaphore_mem>>)
      %c8_i32_58 = arith.constant 8 : i32
    } else {
    }
    %c1_i32_5 = arith.constant 1 : i32
    %15 = arith.addi %arg1, %c1_i32_5 : i32
    %c4_i32_6 = arith.constant 4 : i32
    %16 = arith.cmpi slt, %15, %c4_i32_6 : i32
    %17 = arith.extui %16 : i1 to i32
    %c0_i32_7 = arith.constant 0 : i32
    %18 = arith.cmpi ne, %17, %c0_i32_7 : i32
    scf.if %18 {
      %c1_i32_22 = arith.constant 1 : i32
      %44 = arith.addi %1, %c1_i32_22 : i32
      %c1_i32_23 = arith.constant 1 : i32
      %45 = arith.subi %c1_i32_23, %11 : i32
      %c8_i32_24 = arith.constant 8 : i32
      %46 = arith.muli %44, %c8_i32_24 : i32
      %c0_i32_25 = arith.constant 0 : i32
      %47 = arith.addi %46, %c0_i32_25 : i32
      %48 = arith.index_cast %47 : i32 to index
      %49 = memref.load %arg2[%48] : memref<64xi32, #tpu.memory_space<smem>>
      %c0_i32_26 = arith.constant 0 : i32
      %50 = arith.maxsi %49, %c0_i32_26 : i32
      %c63_i32 = arith.constant 63 : i32
      %51 = arith.minsi %50, %c63_i32 : i32
      %c0_i32_27 = arith.constant 0 : i32
      %52 = tpu.memref_slice %arg4[%51, %c0_i32_27] : memref<64x128xf32, #tpu.memory_space<any>> -> memref<1x128xf32, #tpu.memory_space<any>>
      %c0_i32_28 = arith.constant 0 : i32
      %53 = tpu.memref_slice %arg6[%45, %c0_i32_25, %c0_i32_28] : memref<2x8x128xf32, #tpu.memory_space<vmem>> -> memref<1x1x128xf32, #tpu.memory_space<vmem>>
      %54 = tpu.memref_squeeze %53 : memref<1x1x128xf32, #tpu.memory_space<vmem>> -> memref<1x128xf32, #tpu.memory_space<vmem>>
      %55 = tpu.memref_slice %arg7[%45] : memref<2x!tpu.dma_semaphore, #tpu.memory_space<semaphore_mem>> -> memref<1x!tpu.dma_semaphore, #tpu.memory_space<semaphore_mem>>
      %56 = tpu.memref_squeeze %55 : memref<1x!tpu.dma_semaphore, #tpu.memory_space<semaphore_mem>> -> memref<!tpu.dma_semaphore, #tpu.memory_space<semaphore_mem>>
      tpu.enqueue_dma source(%52 : memref<1x128xf32, #tpu.memory_space<any>>) target(%54 : memref<1x128xf32, #tpu.memory_space<vmem>>) target_semaphore(%56 : memref<!tpu.dma_semaphore, #tpu.memory_space<semaphore_mem>>)
      %c1_i32_29 = arith.constant 1 : i32
      %57 = arith.addi %46, %c1_i32_29 : i32
      %58 = arith.index_cast %57 : i32 to index
      %59 = memref.load %arg2[%58] : memref<64xi32, #tpu.memory_space<smem>>
      %c0_i32_30 = arith.constant 0 : i32
      %60 = arith.maxsi %59, %c0_i32_30 : i32
      %c63_i32_31 = arith.constant 63 : i32
      %61 = arith.minsi %60, %c63_i32_31 : i32
      %c0_i32_32 = arith.constant 0 : i32
      %62 = tpu.memref_slice %arg4[%61, %c0_i32_32] : memref<64x128xf32, #tpu.memory_space<any>> -> memref<1x128xf32, #tpu.memory_space<any>>
      %c0_i32_33 = arith.constant 0 : i32
      %63 = tpu.memref_slice %arg6[%45, %c1_i32_29, %c0_i32_33] : memref<2x8x128xf32, #tpu.memory_space<vmem>> -> memref<1x1x128xf32, #tpu.memory_space<vmem>>
      %64 = tpu.memref_squeeze %63 : memref<1x1x128xf32, #tpu.memory_space<vmem>> -> memref<1x128xf32, #tpu.memory_space<vmem>>
      %65 = tpu.memref_slice %arg7[%45] : memref<2x!tpu.dma_semaphore, #tpu.memory_space<semaphore_mem>> -> memref<1x!tpu.dma_semaphore, #tpu.memory_space<semaphore_mem>>
      %66 = tpu.memref_squeeze %65 : memref<1x!tpu.dma_semaphore, #tpu.memory_space<semaphore_mem>> -> memref<!tpu.dma_semaphore, #tpu.memory_space<semaphore_mem>>
      tpu.enqueue_dma source(%62 : memref<1x128xf32, #tpu.memory_space<any>>) target(%64 : memref<1x128xf32, #tpu.memory_space<vmem>>) target_semaphore(%66 : memref<!tpu.dma_semaphore, #tpu.memory_space<semaphore_mem>>)
      %c2_i32_34 = arith.constant 2 : i32
      %67 = arith.addi %46, %c2_i32_34 : i32
      %68 = arith.index_cast %67 : i32 to index
      %69 = memref.load %arg2[%68] : memref<64xi32, #tpu.memory_space<smem>>
      %c0_i32_35 = arith.constant 0 : i32
      %70 = arith.maxsi %69, %c0_i32_35 : i32
      %c63_i32_36 = arith.constant 63 : i32
      %71 = arith.minsi %70, %c63_i32_36 : i32
      %c0_i32_37 = arith.constant 0 : i32
      %72 = tpu.memref_slice %arg4[%71, %c0_i32_37] : memref<64x128xf32, #tpu.memory_space<any>> -> memref<1x128xf32, #tpu.memory_space<any>>
      %c0_i32_38 = arith.constant 0 : i32
      %73 = tpu.memref_slice %arg6[%45, %c2_i32_34, %c0_i32_38] : memref<2x8x128xf32, #tpu.memory_space<vmem>> -> memref<1x1x128xf32, #tpu.memory_space<vmem>>
      %74 = tpu.memref_squeeze %73 : memref<1x1x128xf32, #tpu.memory_space<vmem>> -> memref<1x128xf32, #tpu.memory_space<vmem>>
      %75 = tpu.memref_slice %arg7[%45] : memref<2x!tpu.dma_semaphore, #tpu.memory_space<semaphore_mem>> -> memref<1x!tpu.dma_semaphore, #tpu.memory_space<semaphore_mem>>
      %76 = tpu.memref_squeeze %75 : memref<1x!tpu.dma_semaphore, #tpu.memory_space<semaphore_mem>> -> memref<!tpu.dma_semaphore, #tpu.memory_space<semaphore_mem>>
      tpu.enqueue_dma source(%72 : memref<1x128xf32, #tpu.memory_space<any>>) target(%74 : memref<1x128xf32, #tpu.memory_space<vmem>>) target_semaphore(%76 : memref<!tpu.dma_semaphore, #tpu.memory_space<semaphore_mem>>)
      %c3_i32 = arith.constant 3 : i32
      %77 = arith.addi %46, %c3_i32 : i32
      %78 = arith.index_cast %77 : i32 to index
      %79 = memref.load %arg2[%78] : memref<64xi32, #tpu.memory_space<smem>>
      %c0_i32_39 = arith.constant 0 : i32
      %80 = arith.maxsi %79, %c0_i32_39 : i32
      %c63_i32_40 = arith.constant 63 : i32
      %81 = arith.minsi %80, %c63_i32_40 : i32
      %c0_i32_41 = arith.constant 0 : i32
      %82 = tpu.memref_slice %arg4[%81, %c0_i32_41] : memref<64x128xf32, #tpu.memory_space<any>> -> memref<1x128xf32, #tpu.memory_space<any>>
      %c0_i32_42 = arith.constant 0 : i32
      %83 = tpu.memref_slice %arg6[%45, %c3_i32, %c0_i32_42] : memref<2x8x128xf32, #tpu.memory_space<vmem>> -> memref<1x1x128xf32, #tpu.memory_space<vmem>>
      %84 = tpu.memref_squeeze %83 : memref<1x1x128xf32, #tpu.memory_space<vmem>> -> memref<1x128xf32, #tpu.memory_space<vmem>>
      %85 = tpu.memref_slice %arg7[%45] : memref<2x!tpu.dma_semaphore, #tpu.memory_space<semaphore_mem>> -> memref<1x!tpu.dma_semaphore, #tpu.memory_space<semaphore_mem>>
      %86 = tpu.memref_squeeze %85 : memref<1x!tpu.dma_semaphore, #tpu.memory_space<semaphore_mem>> -> memref<!tpu.dma_semaphore, #tpu.memory_space<semaphore_mem>>
      tpu.enqueue_dma source(%82 : memref<1x128xf32, #tpu.memory_space<any>>) target(%84 : memref<1x128xf32, #tpu.memory_space<vmem>>) target_semaphore(%86 : memref<!tpu.dma_semaphore, #tpu.memory_space<semaphore_mem>>)
      %c4_i32_43 = arith.constant 4 : i32
      %87 = arith.addi %46, %c4_i32_43 : i32
      %88 = arith.index_cast %87 : i32 to index
      %89 = memref.load %arg2[%88] : memref<64xi32, #tpu.memory_space<smem>>
      %c0_i32_44 = arith.constant 0 : i32
      %90 = arith.maxsi %89, %c0_i32_44 : i32
      %c63_i32_45 = arith.constant 63 : i32
      %91 = arith.minsi %90, %c63_i32_45 : i32
      %c0_i32_46 = arith.constant 0 : i32
      %92 = tpu.memref_slice %arg4[%91, %c0_i32_46] : memref<64x128xf32, #tpu.memory_space<any>> -> memref<1x128xf32, #tpu.memory_space<any>>
      %c0_i32_47 = arith.constant 0 : i32
      %93 = tpu.memref_slice %arg6[%45, %c4_i32_43, %c0_i32_47] : memref<2x8x128xf32, #tpu.memory_space<vmem>> -> memref<1x1x128xf32, #tpu.memory_space<vmem>>
      %94 = tpu.memref_squeeze %93 : memref<1x1x128xf32, #tpu.memory_space<vmem>> -> memref<1x128xf32, #tpu.memory_space<vmem>>
      %95 = tpu.memref_slice %arg7[%45] : memref<2x!tpu.dma_semaphore, #tpu.memory_space<semaphore_mem>> -> memref<1x!tpu.dma_semaphore, #tpu.memory_space<semaphore_mem>>
      %96 = tpu.memref_squeeze %95 : memref<1x!tpu.dma_semaphore, #tpu.memory_space<semaphore_mem>> -> memref<!tpu.dma_semaphore, #tpu.memory_space<semaphore_mem>>
      tpu.enqueue_dma source(%92 : memref<1x128xf32, #tpu.memory_space<any>>) target(%94 : memref<1x128xf32, #tpu.memory_space<vmem>>) target_semaphore(%96 : memref<!tpu.dma_semaphore, #tpu.memory_space<semaphore_mem>>)
      %c5_i32 = arith.constant 5 : i32
      %97 = arith.addi %46, %c5_i32 : i32
      %98 = arith.index_cast %97 : i32 to index
      %99 = memref.load %arg2[%98] : memref<64xi32, #tpu.memory_space<smem>>
      %c0_i32_48 = arith.constant 0 : i32
      %100 = arith.maxsi %99, %c0_i32_48 : i32
      %c63_i32_49 = arith.constant 63 : i32
      %101 = arith.minsi %100, %c63_i32_49 : i32
      %c0_i32_50 = arith.constant 0 : i32
      %102 = tpu.memref_slice %arg4[%101, %c0_i32_50] : memref<64x128xf32, #tpu.memory_space<any>> -> memref<1x128xf32, #tpu.memory_space<any>>
      %c0_i32_51 = arith.constant 0 : i32
      %103 = tpu.memref_slice %arg6[%45, %c5_i32, %c0_i32_51] : memref<2x8x128xf32, #tpu.memory_space<vmem>> -> memref<1x1x128xf32, #tpu.memory_space<vmem>>
      %104 = tpu.memref_squeeze %103 : memref<1x1x128xf32, #tpu.memory_space<vmem>> -> memref<1x128xf32, #tpu.memory_space<vmem>>
      %105 = tpu.memref_slice %arg7[%45] : memref<2x!tpu.dma_semaphore, #tpu.memory_space<semaphore_mem>> -> memref<1x!tpu.dma_semaphore, #tpu.memory_space<semaphore_mem>>
      %106 = tpu.memref_squeeze %105 : memref<1x!tpu.dma_semaphore, #tpu.memory_space<semaphore_mem>> -> memref<!tpu.dma_semaphore, #tpu.memory_space<semaphore_mem>>
      tpu.enqueue_dma source(%102 : memref<1x128xf32, #tpu.memory_space<any>>) target(%104 : memref<1x128xf32, #tpu.memory_space<vmem>>) target_semaphore(%106 : memref<!tpu.dma_semaphore, #tpu.memory_space<semaphore_mem>>)
      %c6_i32 = arith.constant 6 : i32
      %107 = arith.addi %46, %c6_i32 : i32
      %108 = arith.index_cast %107 : i32 to index
      %109 = memref.load %arg2[%108] : memref<64xi32, #tpu.memory_space<smem>>
      %c0_i32_52 = arith.constant 0 : i32
      %110 = arith.maxsi %109, %c0_i32_52 : i32
      %c63_i32_53 = arith.constant 63 : i32
      %111 = arith.minsi %110, %c63_i32_53 : i32
      %c0_i32_54 = arith.constant 0 : i32
      %112 = tpu.memref_slice %arg4[%111, %c0_i32_54] : memref<64x128xf32, #tpu.memory_space<any>> -> memref<1x128xf32, #tpu.memory_space<any>>
      %c0_i32_55 = arith.constant 0 : i32
      %113 = tpu.memref_slice %arg6[%45, %c6_i32, %c0_i32_55] : memref<2x8x128xf32, #tpu.memory_space<vmem>> -> memref<1x1x128xf32, #tpu.memory_space<vmem>>
      %114 = tpu.memref_squeeze %113 : memref<1x1x128xf32, #tpu.memory_space<vmem>> -> memref<1x128xf32, #tpu.memory_space<vmem>>
      %115 = tpu.memref_slice %arg7[%45] : memref<2x!tpu.dma_semaphore, #tpu.memory_space<semaphore_mem>> -> memref<1x!tpu.dma_semaphore, #tpu.memory_space<semaphore_mem>>
      %116 = tpu.memref_squeeze %115 : memref<1x!tpu.dma_semaphore, #tpu.memory_space<semaphore_mem>> -> memref<!tpu.dma_semaphore, #tpu.memory_space<semaphore_mem>>
      tpu.enqueue_dma source(%112 : memref<1x128xf32, #tpu.memory_space<any>>) target(%114 : memref<1x128xf32, #tpu.memory_space<vmem>>) target_semaphore(%116 : memref<!tpu.dma_semaphore, #tpu.memory_space<semaphore_mem>>)
      %c7_i32 = arith.constant 7 : i32
      %117 = arith.addi %46, %c7_i32 : i32
      %118 = arith.index_cast %117 : i32 to index
      %119 = memref.load %arg2[%118] : memref<64xi32, #tpu.memory_space<smem>>
      %c0_i32_56 = arith.constant 0 : i32
      %120 = arith.maxsi %119, %c0_i32_56 : i32
      %c63_i32_57 = arith.constant 63 : i32
      %121 = arith.minsi %120, %c63_i32_57 : i32
      %c0_i32_58 = arith.constant 0 : i32
      %122 = tpu.memref_slice %arg4[%121, %c0_i32_58] : memref<64x128xf32, #tpu.memory_space<any>> -> memref<1x128xf32, #tpu.memory_space<any>>
      %c0_i32_59 = arith.constant 0 : i32
      %123 = tpu.memref_slice %arg6[%45, %c7_i32, %c0_i32_59] : memref<2x8x128xf32, #tpu.memory_space<vmem>> -> memref<1x1x128xf32, #tpu.memory_space<vmem>>
      %124 = tpu.memref_squeeze %123 : memref<1x1x128xf32, #tpu.memory_space<vmem>> -> memref<1x128xf32, #tpu.memory_space<vmem>>
      %125 = tpu.memref_slice %arg7[%45] : memref<2x!tpu.dma_semaphore, #tpu.memory_space<semaphore_mem>> -> memref<1x!tpu.dma_semaphore, #tpu.memory_space<semaphore_mem>>
      %126 = tpu.memref_squeeze %125 : memref<1x!tpu.dma_semaphore, #tpu.memory_space<semaphore_mem>> -> memref<!tpu.dma_semaphore, #tpu.memory_space<semaphore_mem>>
      tpu.enqueue_dma source(%122 : memref<1x128xf32, #tpu.memory_space<any>>) target(%124 : memref<1x128xf32, #tpu.memory_space<vmem>>) target_semaphore(%126 : memref<!tpu.dma_semaphore, #tpu.memory_space<semaphore_mem>>)
      %c8_i32_60 = arith.constant 8 : i32
    } else {
    }
    %c0_i32_8 = arith.constant 0 : i32
    %c0_i32_9 = arith.constant 0 : i32
    %19 = tpu.memref_slice %arg6[%11, %c0_i32_8, %c0_i32_9] : memref<2x8x128xf32, #tpu.memory_space<vmem>> -> memref<1x8x128xf32, #tpu.memory_space<vmem>>
    %20 = tpu.memref_squeeze %19 : memref<1x8x128xf32, #tpu.memory_space<vmem>> -> memref<8x128xf32, #tpu.memory_space<vmem>>
    %c0_i32_10 = arith.constant 0 : i32
    %c0_i32_11 = arith.constant 0 : i32
    %21 = tpu.memref_slice %arg6[%11, %c0_i32_10, %c0_i32_11] : memref<2x8x128xf32, #tpu.memory_space<vmem>> -> memref<1x8x128xf32, #tpu.memory_space<vmem>>
    %22 = tpu.memref_squeeze %21 : memref<1x8x128xf32, #tpu.memory_space<vmem>> -> memref<8x128xf32, #tpu.memory_space<vmem>>
    %23 = tpu.memref_slice %arg7[%11] : memref<2x!tpu.dma_semaphore, #tpu.memory_space<semaphore_mem>> -> memref<1x!tpu.dma_semaphore, #tpu.memory_space<semaphore_mem>>
    %24 = tpu.memref_squeeze %23 : memref<1x!tpu.dma_semaphore, #tpu.memory_space<semaphore_mem>> -> memref<!tpu.dma_semaphore, #tpu.memory_space<semaphore_mem>>
    tpu.wait_dma2 semaphore(%24 : memref<!tpu.dma_semaphore, #tpu.memory_space<semaphore_mem>>) src(%20 : memref<8x128xf32, #tpu.memory_space<vmem>>) dst(%22 : memref<8x128xf32, #tpu.memory_space<vmem>>)
    %c4_i32_12 = arith.constant 4 : i32
    %c0_i32_13 = arith.constant 0 : i32
    %25 = arith.cmpi eq, %c4_i32_12, %c0_i32_13 : i32
    %c1_i32_14 = arith.constant 1 : i32
    %26 = arith.select %25, %c1_i32_14, %c4_i32_12 : i32
    %27 = arith.remsi %1, %26 : i32
    %c0_i32_15 = arith.constant 0 : i32
    %28 = arith.cmpi ne, %27, %c0_i32_15 : i32
    %c0_i32_16 = arith.constant 0 : i32
    %29 = arith.cmpi slt, %27, %c0_i32_16 : i32
    %c0_i32_17 = arith.constant 0 : i32
    %30 = arith.cmpi slt, %26, %c0_i32_17 : i32
    %31 = arith.xori %29, %30 : i1
    %32 = arith.andi %31, %28 : i1
    %33 = arith.addi %27, %26 : i32
    %34 = arith.select %32, %33, %27 : i32
    %c8_i32 = arith.constant 8 : i32
    %35 = arith.muli %34, %c8_i32 : i32
    %36 = tpu.assume_multiple %35, 8 : i32
    %37 = arith.index_cast %11 : i32 to index
    %c0 = arith.constant 0 : index
    %c0_18 = arith.constant 0 : index
    %38 = vector.load %arg6[%37, %c0, %c0_18] : memref<2x8x128xf32, #tpu.memory_space<vmem>>, vector<1x8x128xf32>
    %39 = vector.shape_cast %38 : vector<1x8x128xf32> to vector<8x128xf32>
    %40 = arith.index_cast %36 : i32 to index
    %c0_19 = arith.constant 0 : index
    %41 = vector.load %arg3[%40, %c0_19] : memref<32x128xf32, #tpu.memory_space<vmem>>, vector<8x128xf32>
    %42 = arith.addf %39, %41 : vector<8x128xf32>
    %c0_20 = arith.constant 0 : index
    %c0_21 = arith.constant 0 : index
    %43 = vector.load %arg5[%c0_20, %c0_21] : memref<8x128xf32, #tpu.memory_space<vmem>>, vector<8x128xf32>
    tpu.vector_store %arg5[%c0_20, %c0_21], %42 {strides = array<i32>} : memref<8x128xf32, #tpu.memory_space<vmem>>, vector<8x128xf32>,
    return
  }
  func.func @transform_0(%arg0: i32, %arg1: i32, %arg2: memref<64xi32, #tpu.memory_space<smem>>) -> (i32, i32) {
    %c0_i32 = arith.constant 0 : i32
    %c0_i32_0 = arith.constant 0 : i32
    %c0_i32_1 = arith.constant 0 : i32
    return %c0_i32, %c0_i32_0 : i32, i32
  }
  func.func @transform_2(%arg0: i32, %arg1: i32, %arg2: memref<64xi32, #tpu.memory_space<smem>>) -> (i32, i32) {
    %c4_i32 = arith.constant 4 : i32
    %0 = arith.muli %arg0, %c4_i32 : i32
    %1 = arith.addi %0, %arg1 : i32
    %c0_i32 = arith.constant 0 : i32
    %c0_i32_0 = arith.constant 0 : i32
    return %1, %c0_i32 : i32, i32
  }
}

</mosaic_0001>

<llo_original>
// kernel: tpu_custom_call.1
$region0: #{tpu_custom_call.1}
  #allocation0 [shape = 'u32[]', space=smem, size = 0x4, offset = 0x4, fixed_abs, tag = 'smem constant byte address 0x4 - core index']
  #allocation1 [shape = 'u32[144,128]{1,0:T(1,128)}', space=vmem, size = 0x12000, scoped, tag = 'internal scratch']
  #allocation2 [shape = 'f32[2,8,128]{2,1,0:T(8,128)}', space=vmem, size = 0x2000, scoped, tag = 'scratch operand']
  #allocation3 [shape = 's32[2]{0}', space=sflag, size = 0x8, scoped, tag = 'scratch operand']
  #allocation4 [shape = 's32[1]{0}', space=sflag, size = 0x4, scoped, tag = 'scoped memory for tpu_custom_call.1']
  #allocation5 [shape = 'u8[512]{0}', space=smem, size = 0x200, scoped, tag = 'prefetched SMEM operand 0']
  #allocation10 [shape = 's32[]', space=sflag, size = 0x4, offset = 0, fixed_abs, tag = 'sflag constant byte address 0x0 - dummy sync flag']
  #allocation11 [shape = 's32[]', space=sflag, size = 0x4, offset = 0, fixed_abs, tag = 'sflag constant byte address 0x0 - dummy sync flag']
  #allocation12 [shape = 'u32[]', space=smem, size = 0x4, offset = 0x44, fixed_abs, tag = 'smem constant byte address 0x44 - assertion arg 0']
  #allocation13 [shape = 'u32[]', space=smem, size = 0x4, offset = 0x48, fixed_abs, tag = 'smem constant byte address 0x48 - assertion arg 1']
  #allocation14 [shape = 's32[]', space=sflag, size = 0x4, offset = 0, fixed_abs, tag = 'sflag constant byte address 0x0 - dummy sync flag']
  #allocation15 [shape = 's32[]', space=sflag, size = 0x4, offset = 0, fixed_abs, tag = 'sflag constant byte address 0x0 - dummy sync flag']
  #allocation16 [shape = 's32[]', space=sflag, size = 0x4, offset = 0, fixed_abs, tag = 'sflag constant byte address 0x0 - dummy sync flag']
  #allocation17 [shape = 's32[]', space=sflag, size = 0x4, offset = 0, fixed_abs, tag = 'sflag constant byte address 0x0 - dummy sync flag']
  #allocation18 [shape = 's32[]', space=sflag, size = 0x4, offset = 0, fixed_abs, tag = 'sflag constant byte address 0x0 - dummy sync flag']
  #allocation19 [shape = 's32[]', space=sflag, size = 0x4, offset = 0, fixed_abs, tag = 'sflag constant byte address 0x0 - dummy sync flag']
  #allocation20 [shape = 's32[]', space=sflag, size = 0x4, offset = 0, fixed_abs, tag = 'sflag constant byte address 0x0 - dummy sync flag']
  #allocation21 [shape = 's32[]', space=sflag, size = 0x4, offset = 0, fixed_abs, tag = 'sflag constant byte address 0x0 - dummy sync flag']
  #allocation22 [shape = 's32[]', space=sflag, size = 0x4, offset = 0, fixed_abs, tag = 'sflag constant byte address 0x0 - dummy sync flag']
  #allocation23 [shape = 's32[]', space=sflag, size = 0x4, offset = 0, fixed_abs, tag = 'sflag constant byte address 0x0 - dummy sync flag']
  #allocation24 [shape = 's32[]', space=sflag, size = 0x4, offset = 0, fixed_abs, tag = 'sflag constant byte address 0x0 - dummy sync flag']
  #allocation25 [shape = 's32[]', space=sflag, size = 0x4, offset = 0, fixed_abs, tag = 'sflag constant byte address 0x0 - dummy sync flag']
  #allocation26 [shape = 's32[]', space=sflag, size = 0x4, offset = 0, fixed_abs, tag = 'sflag constant byte address 0x0 - dummy sync flag']
  #allocation27 [shape = 's32[]', space=sflag, size = 0x4, offset = 0, fixed_abs, tag = 'sflag constant byte address 0x0 - dummy sync flag']
  #allocation28 [shape = 's32[]', space=sflag, size = 0x4, offset = 0, fixed_abs, tag = 'sflag constant byte address 0x0 - dummy sync flag']
  #allocation29 [shape = 's32[]', space=sflag, size = 0x4, offset = 0, fixed_abs, tag = 'sflag constant byte address 0x0 - dummy sync flag']
  #allocation30 [shape = 's32[]', space=sflag, size = 0x4, offset = 0, fixed_abs, tag = 'sflag constant byte address 0x0 - dummy sync flag']
  #allocation31 [shape = 's32[]', space=sflag, size = 0x4, offset = 0, fixed_abs, tag = 'sflag constant byte address 0x0 - dummy sync flag']
  #allocation32 [shape = 's32[]', space=sflag, size = 0x4, offset = 0, fixed_abs, tag = 'sflag constant byte address 0x0 - dummy sync flag']
  #allocation33 [shape = 's32[]', space=sflag, size = 0x4, offset = 0, fixed_abs, tag = 'sflag constant byte address 0x0 - dummy sync flag']
  #allocation34 [shape = 's32[]', space=sflag, size = 0x4, offset = 0, fixed_abs, tag = 'sflag constant byte address 0x0 - dummy sync flag']
  #allocation35 [shape = 's32[]', space=sflag, size = 0x4, offset = 0, fixed_abs, tag = 'sflag constant byte address 0x0 - dummy sync flag']
  #allocation36 [shape = 's32[]', space=sflag, size = 0x4, offset = 0, fixed_abs, tag = 'sflag constant byte address 0x0 - dummy sync flag']
  #allocation37 [shape = 's32[]', space=sflag, size = 0x4, offset = 0, fixed_abs, tag = 'sflag constant byte address 0x0 - dummy sync flag']
  #allocation38 [shape = 's32[]', space=sflag, size = 0x4, offset = 0, fixed_abs, tag = 'sflag constant byte address 0x0 - dummy sync flag']
  #allocation39 [shape = 's32[]', space=sflag, size = 0x4, offset = 0, fixed_abs, tag = 'sflag constant byte address 0x0 - dummy sync flag']
  #allocation40 [shape = 's32[]', space=sflag, size = 0x4, offset = 0, fixed_abs, tag = 'sflag constant byte address 0x0 - dummy sync flag']
  #allocation41 [shape = 's32[]', space=sflag, size = 0x4, offset = 0, fixed_abs, tag = 'sflag constant byte address 0x0 - dummy sync flag']
  #allocation42 [shape = 's32[]', space=sflag, size = 0x4, offset = 0, fixed_abs, tag = 'sflag constant byte address 0x0 - dummy sync flag']
  #allocation43 [shape = 's32[]', space=sflag, size = 0x4, offset = 0, fixed_abs, tag = 'sflag constant byte address 0x0 - dummy sync flag']
  %s0 = inlined_call_operand.hbm [shape: s32[64], index: 0, kind: input, shape index: {}]
  %s1 = inlined_call_operand.hbm [shape: f32[32,128], index: 1, kind: input, shape index: {}]
  %s2 = inlined_call_operand.hbm [shape: f32[64,128], index: 2, kind: input, shape index: {}]
  %s3 = inlined_call_operand.hbm [shape: f32[64,128], index: 3, kind: output, shape index: {}]
  %s4 = sld [smem:[#allocation0]]
  $region113: #{tpu_custom_call.1} parent=0
    _
  %s6 = ssub.s32 1, %s4
  %s7 = scalar_select 0, %s6, %s4
  %9 = dma.hbm_to_smem %s0, 16, [#allocation5], [#allocation4]
  %10 = dma.done [#allocation4], 16
  %11 = sfence
  $region1: #{tpu_custom_call.1} parent=0
    #allocation6 [shape = 'u8[16384]{0}', space=vmem, size = 0x4000, scoped, tag = 'input window, operand 1, single buffered']
    #allocation7 [shape = 's32[2]{0}', space=sflag, size = 0x8, scoped, tag = 'scoped memory for tpu_custom_call.1']
    #allocation8 [shape = 's32[2]{0}', space=sflag, size = 0x8, scoped, tag = 'scoped memory for tpu_custom_call.1']
    #allocation9 [shape = 'u8[8192]{0}', space=vmem, size = 0x2000, scoped, tag = 'output window, operand 0']
    %12 = vsyncpa [#allocation7], 0
    %13 = vsyncpa [#allocation8], 0
    %s14 = scalar_lea.sflag [#allocation8], 1
    %15 = vsyncpa %s14, 0
    loop: start=0, step=1, limit=10
    $region2: #{tpu_custom_call.1} parent=1 // loop_pre_header
      _
    $region3: #{tpu_custom_call.1} parent=1 // loop_header
      %s17 = sphi 0, %s21
      %p18 = scmp.ge.s32.totalorder %s17, 10
      %s24 = sphi 0, %s36
      %s25 = sphi 0, %s32
      %s26 = sphi 0, %s24
      %s27 = sphi 0, %s25
      %s28 = sphi 0, %s26
      %s29 = sphi 0, %s27
      %s37 = sphi 0, %s37
      %s39 = sphi 0, %s37
      %s40 = sphi 0, %s39
      %s54 = sphi 0, %s40
      %s64 = sphi 0, %s66
      %s67 = sphi 0, %s64
      %s68 = sphi 0, %s67
      %s84 = sphi 0, %s68
    $region4: #{tpu_custom_call.1} parent=1 // loop_header_branch
      %20 = sbr.rel (%p18) target = $region8
    $region5: #{tpu_custom_call.1} parent=1 // loop_body
      %s22 = ssub.s32 %s17, 1
      %s23 = ssub.s32 %s17, 2
      %s30 = sadd.s32 1, %s25
      %p31 = scmp.ge.s32.totalorder %s30, 4
      %s32 = scalar_select %p31, 0, %s30
      %s33 = sadd.s32 1, %s24
      %s34 = scalar_select %p31, %s33, %s24
      %p35 = scmp.ge.s32.totalorder %s34, 2
      %s36 = scalar_select %p35, 0, %s34
      %s38 = sadd.s32 %s37, 1
      %p41 = scmp.eq.s32.totalorder %s17, 7
      %p42 = scmp.ne.s32.totalorder %s37, %s39
      %p43 = scmp.eq.s32.totalorder %s17, 0
      %p44 = por %p42, %p43
      %p45 = scmp.ne.s32.totalorder %s37, %s39
      %p46 = scmp.eq.s32.totalorder %s22, 7
      %p47 = por %p45, %p46
      %p48 = scmp.ne.s32.totalorder %s39, %s40
      %p49 = scmp.eq.s32.totalorder %s22, 0
      %p50 = por %p48, %p49
      %p51 = scmp.ne.s32.totalorder %s39, %s40
      %p52 = scmp.eq.s32.totalorder %s23, 7
      %p53 = por %p51, %p52
      %p55 = scmp.ne.s32.totalorder %s40, %s54
      %p56 = scmp.eq.s32.totalorder %s23, 0
      %p57 = por %p55, %p56
      %s58 = smul.u32 %s24, 4
      %s59 = sadd.s32 %s58, %s25
      %s60 = smul.u32 %s36, 4
      %s61 = sadd.s32 %s60, %s32
      %s62 = ssub.s32 %s59, %s61
      %p63 = scmp.eq.s32.totalorder %s62, 0
      %s65 = sadd.s32 %s64, 1
      %s66 = scalar_select %p63, %s64, %s65
      %p69 = pneg %p63
      %p70 = scmp.eq.s32.totalorder %s17, 7
      %p71 = por %p69, %p70
      %p72 = scmp.ne.s32.totalorder %s64, %s67
      %p73 = scmp.eq.s32.totalorder %s17, 0
      %p74 = por %p72, %p73
      %p75 = scmp.ne.s32.totalorder %s64, %s67
      %p76 = scmp.eq.s32.totalorder %s22, 7
      %p77 = por %p75, %p76
      %p78 = scmp.ne.s32.totalorder %s67, %s68
      %p79 = scmp.eq.s32.totalorder %s22, 0
      %p80 = por %p78, %p79
      %p81 = scmp.ne.s32.totalorder %s67, %s68
      %p82 = scmp.eq.s32.totalorder %s23, 7
      %p83 = por %p81, %p82
      %p85 = scmp.ne.s32.totalorder %s68, %s84
      %p86 = scmp.eq.s32.totalorder %s23, 0
      %p87 = por %p85, %p86
      %p88 = scmp.le.s32.totalorder 1, %s17
      %p89 = scmp.lt.s32.totalorder %s17, 9
      %p90 = pnand %p88, %p89
      %p91 = pneg %p90
      // Predicated region
      $region9: #{tpu_custom_call.1} parent=5 // pred_check
        _
      $region10: #{tpu_custom_call.1} parent=5 // pred_check_branch
        %93 = sbr.rel (%p90) target = $region12
      $region11: #{tpu_custom_call.1} parent=5 // pred_region
        %s94 = ssub.s32 %s17, 1
        // Predicated region
        $region13: #{tpu_custom_call.1} parent=11 // pred_check
          %p95 = pneg %p50
        $region14: #{tpu_custom_call.1} parent=11 // pred_check_branch
          %97 = sbr.rel (%p95) target = $region16
        $region15: #{tpu_custom_call.1} parent=11 // pred_region
          %s99 = ssub.s32 512, 512
          %100 = vsyncadd [#allocation7], %s99
          %s101 = sshll.u32 [#allocation6], 4
          %s102 = int_to_ptr.vmem [resolvable:$true] %s101
          %107 = dma.hbm_to_vmem [thread:$0]  %s1, 512, %s102, [#allocation7], 128, 128, 8
        $region16: #{tpu_custom_call.1} parent=11 // pred_fallthru
          _
      $region12: #{tpu_custom_call.1} parent=5 // pred_fallthru
        _
      %p108 = scmp.lt.s32.totalorder %s17, 8
      // Predicated region
      $region17: #{tpu_custom_call.1} parent=5 // pred_check
        %p109 = pneg %p108
      $region18: #{tpu_custom_call.1} parent=5 // pred_check_branch
        %111 = sbr.rel (%p109) target = $region20
      $region19: #{tpu_custom_call.1} parent=5 // pred_region
        _
      $region20: #{tpu_custom_call.1} parent=5 // pred_fallthru
        _
      %p112 = scmp.le.s32.totalorder 1, %s17
      %p113 = scmp.lt.s32.totalorder %s17, 9
      %p114 = pnand %p112, %p113
      %p115 = pneg %p114
      // Predicated region
      $region21: #{tpu_custom_call.1} parent=5 // pred_check
        _
      $region22: #{tpu_custom_call.1} parent=5 // pred_check_branch
        %117 = sbr.rel (%p114) target = $region24
      $region23: #{tpu_custom_call.1} parent=5 // pred_region
        %s118 = ssub.s32 %s17, 1
        // Predicated region
        $region25: #{tpu_custom_call.1} parent=23 // pred_check
          %p119 = pneg %p50
        $region26: #{tpu_custom_call.1} parent=23 // pred_check_branch
          %121 = sbr.rel (%p119) target = $region28
        $region27: #{tpu_custom_call.1} parent=23 // pred_region
          %122 = dma.done [#allocation7], 512
        $region28: #{tpu_custom_call.1} parent=23 // pred_fallthru
          _
        %p123 = pneg %p50
        %p124 = pneg %p47
        %p125 = pneg %p80
        %p126 = pneg %p77
        %s127 = sand.u32 %s67, 1
        %s128 = scalar_lea.sflag [#allocation8], %s127
        %s129 = sand.u32 %s67, 1
        %s130 = smul.addr %s129, 8
        %s131 = scalar_lea.vmem [#allocation9], %s130
        %s132 = smul.u32 %s26, 4
        %s133 = sadd.s32 %s132, %s27
        %s134 = smul.u32 %s26, 4
        %s135 = sadd.s32 %s134, %s27
        %p136 = scmp.lt.s32.totalorder %s27, 0
        %s137 = ssub.s32 0, %s27
        %s138 = scalar_select %p136, %s137, %s27
        %s139 = sand.u32 %s138, 1
        %s140 = ssub.s32 0, %s139
        %s141 = scalar_select %p136, %s140, %s139
        %p142 = scmp.ne.s32.totalorder %s141, 0
        %p143 = scmp.lt.s32.totalorder %s141, 0
        %p144 = pnand %p143, %p142
        %p145 = pneg %p144
        %s146 = sadd.s32 %s141, 2
        %s147 = scalar_select %p145, %s146, %s141
        %p148 = scmp.eq.s32.totalorder %s27, 0
        // Predicated region
        $region29: #{tpu_custom_call.1} parent=23 // pred_check
          %p149 = pneg %p148
        $region30: #{tpu_custom_call.1} parent=23 // pred_check_branch
          %151 = sbr.rel (%p149) target = $region32
        $region31: #{tpu_custom_call.1} parent=23 // pred_region
          %s152 = smul.u32 %s135, 8
          %s153 = sld [smem:[#allocation5 + %s152]]
          %p154 = scmp.gt.s32.totalorder %s153, 0
          %s155 = scalar_select %p154, %s153, 0
          %p156 = scmp.lt.s32.totalorder %s155, 63
          %s157 = scalar_select %p156, %s155, 63
          %s158 = smul.addr %s157, 16
          %s159 = scalar_lea.hbm %s2, %s158
          %s160 = smul.u32 %s147, 8
          %s161 = scalar_lea.vmem [#allocation2], %s160
          %s162 = scalar_lea.sflag [#allocation3], %s147
          // Predicated region
          $region33: #{tpu_custom_call.1} parent=31 // pred_check
            _
          $region34: #{tpu_custom_call.1} parent=31 // pred_check_branch
            %164 = sbr.rel target = $region36
          $region35: #{tpu_custom_call.1} parent=31 // pred_region
            %165 = sst [smem:[#allocation12]] [#allocation11]
            %166 = sst [smem:[#allocation13]] [#allocation10]
          $region36: #{tpu_custom_call.1} parent=31 // pred_fallthru
            _
          %168 = shalt.err (0)
          %s170 = sshll.u32 %s161, 4
          %s171 = int_to_ptr.vmem [resolvable:$true] %s170
          %173 = dma.hbm_to_vmem [thread:$0]  %s159, 16, %s171, %s162
          %s174 = sadd.s32 %s152, 1
          %s175 = sld [smem:[#allocation5 + %s174]]
          %p176 = scmp.gt.s32.totalorder %s175, 0
          %s177 = scalar_select %p176, %s175, 0
          %p178 = scmp.lt.s32.totalorder %s177, 63
          %s179 = scalar_select %p178, %s177, 63
          %s180 = smul.addr %s179, 16
          %s181 = scalar_lea.hbm %s2, %s180
          %s182 = sadd.s32 1, %s160
          %s183 = scalar_lea.vmem [#allocation2], %s182
          // Predicated region
          $region37: #{tpu_custom_call.1} parent=31 // pred_check
            _
          $region38: #{tpu_custom_call.1} parent=31 // pred_check_branch
            %185 = sbr.rel target = $region40
          $region39: #{tpu_custom_call.1} parent=31 // pred_region
            %186 = sst [smem:[#allocation12]] [#allocation15]
            %187 = sst [smem:[#allocation13]] [#allocation14]
          $region40: #{tpu_custom_call.1} parent=31 // pred_fallthru
            _
          %189 = shalt.err (0)
          %s191 = sshll.u32 %s183, 4
          %s192 = int_to_ptr.vmem [resolvable:$true] %s191
          %194 = dma.hbm_to_vmem [thread:$0]  %s181, 16, %s192, %s162
          %s195 = sadd.s32 %s152, 2
          %s196 = sld [smem:[#allocation5 + %s195]]
          %p197 = scmp.gt.s32.totalorder %s196, 0
          %s198 = scalar_select %p197, %s196, 0
          %p199 = scmp.lt.s32.totalorder %s198, 63
          %s200 = scalar_select %p199, %s198, 63
          %s201 = smul.addr %s200, 16
          %s202 = scalar_lea.hbm %s2, %s201
          %s203 = sadd.s32 2, %s160
          %s204 = scalar_lea.vmem [#allocation2], %s203
          // Predicated region
          $region41: #{tpu_custom_call.1} parent=31 // pred_check
            _
          $region42: #{tpu_custom_call.1} parent=31 // pred_check_branch
            %206 = sbr.rel target = $region44
          $region43: #{tpu_custom_call.1} parent=31 // pred_region
            %207 = sst [smem:[#allocation12]] [#allocation17]
            %208 = sst [smem:[#allocation13]] [#allocation16]
          $region44: #{tpu_custom_call.1} parent=31 // pred_fallthru
            _
          %210 = shalt.err (0)
          %s212 = sshll.u32 %s204, 4
          %s213 = int_to_ptr.vmem [resolvable:$true] %s212
          %215 = dma.hbm_to_vmem [thread:$0]  %s202, 16, %s213, %s162
          %s216 = sadd.s32 %s152, 3
          %s217 = sld [smem:[#allocation5 + %s216]]
          %p218 = scmp.gt.s32.totalorder %s217, 0
          %s219 = scalar_select %p218, %s217, 0
          %p220 = scmp.lt.s32.totalorder %s219, 63
          %s221 = scalar_select %p220, %s219, 63
          %s222 = smul.addr %s221, 16
          %s223 = scalar_lea.hbm %s2, %s222
          %s224 = sadd.s32 3, %s160
          %s225 = scalar_lea.vmem [#allocation2], %s224
          // Predicated region
          $region45: #{tpu_custom_call.1} parent=31 // pred_check
            _
          $region46: #{tpu_custom_call.1} parent=31 // pred_check_branch
            %227 = sbr.rel target = $region48
          $region47: #{tpu_custom_call.1} parent=31 // pred_region
            %228 = sst [smem:[#allocation12]] [#allocation19]
            %229 = sst [smem:[#allocation13]] [#allocation18]
          $region48: #{tpu_custom_call.1} parent=31 // pred_fallthru
            _
          %231 = shalt.err (0)
          %s233 = sshll.u32 %s225, 4
          %s234 = int_to_ptr.vmem [resolvable:$true] %s233
          %236 = dma.hbm_to_vmem [thread:$0]  %s223, 16, %s234, %s162
          %s237 = sadd.s32 %s152, 4
          %s238 = sld [smem:[#allocation5 + %s237]]
          %p239 = scmp.gt.s32.totalorder %s238, 0
          %s240 = scalar_select %p239, %s238, 0
          %p241 = scmp.lt.s32.totalorder %s240, 63
          %s242 = scalar_select %p241, %s240, 63
          %s243 = smul.addr %s242, 16
          %s244 = scalar_lea.hbm %s2, %s243
          %s245 = sadd.s32 4, %s160
          %s246 = scalar_lea.vmem [#allocation2], %s245
          // Predicated region
          $region49: #{tpu_custom_call.1} parent=31 // pred_check
            _
          $region50: #{tpu_custom_call.1} parent=31 // pred_check_branch
            %248 = sbr.rel target = $region52
          $region51: #{tpu_custom_call.1} parent=31 // pred_region
            %249 = sst [smem:[#allocation12]] [#allocation21]
            %250 = sst [smem:[#allocation13]] [#allocation20]
          $region52: #{tpu_custom_call.1} parent=31 // pred_fallthru
            _
          %252 = shalt.err (0)
          %s254 = sshll.u32 %s246, 4
          %s255 = int_to_ptr.vmem [resolvable:$true] %s254
          %257 = dma.hbm_to_vmem [thread:$0]  %s244, 16, %s255, %s162
          %s258 = sadd.s32 %s152, 5
          %s259 = sld [smem:[#allocation5 + %s258]]
          %p260 = scmp.gt.s32.totalorder %s259, 0
          %s261 = scalar_select %p260, %s259, 0
          %p262 = scmp.lt.s32.totalorder %s261, 63
          %s263 = scalar_select %p262, %s261, 63
          %s264 = smul.addr %s263, 16
          %s265 = scalar_lea.hbm %s2, %s264
          %s266 = sadd.s32 5, %s160
          %s267 = scalar_lea.vmem [#allocation2], %s266
          // Predicated region
          $region53: #{tpu_custom_call.1} parent=31 // pred_check
            _
          $region54: #{tpu_custom_call.1} parent=31 // pred_check_branch
            %269 = sbr.rel target = $region56
          $region55: #{tpu_custom_call.1} parent=31 // pred_region
            %270 = sst [smem:[#allocation12]] [#allocation23]
            %271 = sst [smem:[#allocation13]] [#allocation22]
          $region56: #{tpu_custom_call.1} parent=31 // pred_fallthru
            _
          %273 = shalt.err (0)
          %s275 = sshll.u32 %s267, 4
          %s276 = int_to_ptr.vmem [resolvable:$true] %s275
          %278 = dma.hbm_to_vmem [thread:$0]  %s265, 16, %s276, %s162
          %s279 = sadd.s32 %s152, 6
          %s280 = sld [smem:[#allocation5 + %s279]]
          %p281 = scmp.gt.s32.totalorder %s280, 0
          %s282 = scalar_select %p281, %s280, 0
          %p283 = scmp.lt.s32.totalorder %s282, 63
          %s284 = scalar_select %p283, %s282, 63
          %s285 = smul.addr %s284, 16
          %s286 = scalar_lea.hbm %s2, %s285
          %s287 = sadd.s32 6, %s160
          %s288 = scalar_lea.vmem [#allocation2], %s287
          // Predicated region
          $region57: #{tpu_custom_call.1} parent=31 // pred_check
            _
          $region58: #{tpu_custom_call.1} parent=31 // pred_check_branch
            %290 = sbr.rel target = $region60
          $region59: #{tpu_custom_call.1} parent=31 // pred_region
            %291 = sst [smem:[#allocation12]] [#allocation25]
            %292 = sst [smem:[#allocation13]] [#allocation24]
          $region60: #{tpu_custom_call.1} parent=31 // pred_fallthru
            _
          %294 = shalt.err (0)
          %s296 = sshll.u32 %s288, 4
          %s297 = int_to_ptr.vmem [resolvable:$true] %s296
          %299 = dma.hbm_to_vmem [thread:$0]  %s286, 16, %s297, %s162
          %s300 = sadd.s32 %s152, 7
          %s301 = sld [smem:[#allocation5 + %s300]]
          %p302 = scmp.gt.s32.totalorder %s301, 0
          %s303 = scalar_select %p302, %s301, 0
          %p304 = scmp.lt.s32.totalorder %s303, 63
          %s305 = scalar_select %p304, %s303, 63
          %s306 = smul.addr %s305, 16
          %s307 = scalar_lea.hbm %s2, %s306
          %s308 = sadd.s32 7, %s160
          %s309 = scalar_lea.vmem [#allocation2], %s308
          // Predicated region
          $region61: #{tpu_custom_call.1} parent=31 // pred_check
            _
          $region62: #{tpu_custom_call.1} parent=31 // pred_check_branch
            %311 = sbr.rel target = $region64
          $region63: #{tpu_custom_call.1} parent=31 // pred_region
            %312 = sst [smem:[#allocation12]] [#allocation27]
            %313 = sst [smem:[#allocation13]] [#allocation26]
          $region64: #{tpu_custom_call.1} parent=31 // pred_fallthru
            _
          %315 = shalt.err (0)
          %s317 = sshll.u32 %s309, 4
          %s318 = int_to_ptr.vmem [resolvable:$true] %s317
          %320 = dma.hbm_to_vmem [thread:$0]  %s307, 16, %s318, %s162
        $region32: #{tpu_custom_call.1} parent=23 // pred_fallthru
          _
        %s321 = sadd.s32 %s27, 1
        %p322 = scmp.lt.s32.totalorder %s321, 4
        // Predicated region
        $region65: #{tpu_custom_call.1} parent=23 // pred_check
          %p323 = pneg %p322
        $region66: #{tpu_custom_call.1} parent=23 // pred_check_branch
          %325 = sbr.rel (%p323) target = $region68
        $region67: #{tpu_custom_call.1} parent=23 // pred_region
          %s326 = sadd.s32 %s135, 1
          %s327 = ssub.s32 1, %s147
          %s328 = smul.u32 %s326, 8
          %s329 = sld [smem:[#allocation5 + %s328]]
          %p330 = scmp.gt.s32.totalorder %s329, 0
          %s331 = scalar_select %p330, %s329, 0
          %p332 = scmp.lt.s32.totalorder %s331, 63
          %s333 = scalar_select %p332, %s331, 63
          %s334 = smul.addr %s333, 16
          %s335 = scalar_lea.hbm %s2, %s334
          %s336 = smul.u32 %s327, 8
          %s337 = scalar_lea.vmem [#allocation2], %s336
          %s338 = scalar_lea.sflag [#allocation3], %s327
          // Predicated region
          $region69: #{tpu_custom_call.1} parent=67 // pred_check
            _
          $region70: #{tpu_custom_call.1} parent=67 // pred_check_branch
            %340 = sbr.rel target = $region72
          $region71: #{tpu_custom_call.1} parent=67 // pred_region
            %341 = sst [smem:[#allocation12]] [#allocation29]
            %342 = sst [smem:[#allocation13]] [#allocation28]
          $region72: #{tpu_custom_call.1} parent=67 // pred_fallthru
            _
          %344 = shalt.err (0)
          %s346 = sshll.u32 %s337, 4
          %s347 = int_to_ptr.vmem [resolvable:$true] %s346
          %349 = dma.hbm_to_vmem [thread:$0]  %s335, 16, %s347, %s338
          %s350 = sadd.s32 %s328, 1
          %s351 = sld [smem:[#allocation5 + %s350]]
          %p352 = scmp.gt.s32.totalorder %s351, 0
          %s353 = scalar_select %p352, %s351, 0
          %p354 = scmp.lt.s32.totalorder %s353, 63
          %s355 = scalar_select %p354, %s353, 63
          %s356 = smul.addr %s355, 16
          %s357 = scalar_lea.hbm %s2, %s356
          %s358 = sadd.s32 1, %s336
          %s359 = scalar_lea.vmem [#allocation2], %s358
          // Predicated region
          $region73: #{tpu_custom_call.1} parent=67 // pred_check
            _
          $region74: #{tpu_custom_call.1} parent=67 // pred_check_branch
            %361 = sbr.rel target = $region76
          $region75: #{tpu_custom_call.1} parent=67 // pred_region
            %362 = sst [smem:[#allocation12]] [#allocation31]
            %363 = sst [smem:[#allocation13]] [#allocation30]
          $region76: #{tpu_custom_call.1} parent=67 // pred_fallthru
            _
          %365 = shalt.err (0)
          %s367 = sshll.u32 %s359, 4
          %s368 = int_to_ptr.vmem [resolvable:$true] %s367
          %370 = dma.hbm_to_vmem [thread:$0]  %s357, 16, %s368, %s338
          %s371 = sadd.s32 %s328, 2
          %s372 = sld [smem:[#allocation5 + %s371]]
          %p373 = scmp.gt.s32.totalorder %s372, 0
          %s374 = scalar_select %p373, %s372, 0
          %p375 = scmp.lt.s32.totalorder %s374, 63
          %s376 = scalar_select %p375, %s374, 63
          %s377 = smul.addr %s376, 16
          %s378 = scalar_lea.hbm %s2, %s377
          %s379 = sadd.s32 2, %s336
          %s380 = scalar_lea.vmem [#allocation2], %s379
          // Predicated region
          $region77: #{tpu_custom_call.1} parent=67 // pred_check
            _
          $region78: #{tpu_custom_call.1} parent=67 // pred_check_branch
            %382 = sbr.rel target = $region80
          $region79: #{tpu_custom_call.1} parent=67 // pred_region
            %383 = sst [smem:[#allocation12]] [#allocation33]
            %384 = sst [smem:[#allocation13]] [#allocation32]
          $region80: #{tpu_custom_call.1} parent=67 // pred_fallthru
            _
          %386 = shalt.err (0)
          %s388 = sshll.u32 %s380, 4
          %s389 = int_to_ptr.vmem [resolvable:$true] %s388
          %391 = dma.hbm_to_vmem [thread:$0]  %s378, 16, %s389, %s338
          %s392 = sadd.s32 %s328, 3
          %s393 = sld [smem:[#allocation5 + %s392]]
          %p394 = scmp.gt.s32.totalorder %s393, 0
          %s395 = scalar_select %p394, %s393, 0
          %p396 = scmp.lt.s32.totalorder %s395, 63
          %s397 = scalar_select %p396, %s395, 63
          %s398 = smul.addr %s397, 16
          %s399 = scalar_lea.hbm %s2, %s398
          %s400 = sadd.s32 3, %s336
          %s401 = scalar_lea.vmem [#allocation2], %s400
          // Predicated region
          $region81: #{tpu_custom_call.1} parent=67 // pred_check
            _
          $region82: #{tpu_custom_call.1} parent=67 // pred_check_branch
            %403 = sbr.rel target = $region84
          $region83: #{tpu_custom_call.1} parent=67 // pred_region
            %404 = sst [smem:[#allocation12]] [#allocation35]
            %405 = sst [smem:[#allocation13]] [#allocation34]
          $region84: #{tpu_custom_call.1} parent=67 // pred_fallthru
            _
          %407 = shalt.err (0)
          %s409 = sshll.u32 %s401, 4
          %s410 = int_to_ptr.vmem [resolvable:$true] %s409
          %412 = dma.hbm_to_vmem [thread:$0]  %s399, 16, %s410, %s338
          %s413 = sadd.s32 %s328, 4
          %s414 = sld [smem:[#allocation5 + %s413]]
          %p415 = scmp.gt.s32.totalorder %s414, 0
          %s416 = scalar_select %p415, %s414, 0
          %p417 = scmp.lt.s32.totalorder %s416, 63
          %s418 = scalar_select %p417, %s416, 63
          %s419 = smul.addr %s418, 16
          %s420 = scalar_lea.hbm %s2, %s419
          %s421 = sadd.s32 4, %s336
          %s422 = scalar_lea.vmem [#allocation2], %s421
          // Predicated region
          $region85: #{tpu_custom_call.1} parent=67 // pred_check
            _
          $region86: #{tpu_custom_call.1} parent=67 // pred_check_branch
            %424 = sbr.rel target = $region88
          $region87: #{tpu_custom_call.1} parent=67 // pred_region
            %425 = sst [smem:[#allocation12]] [#allocation37]
            %426 = sst [smem:[#allocation13]] [#allocation36]
          $region88: #{tpu_custom_call.1} parent=67 // pred_fallthru
            _
          %428 = shalt.err (0)
          %s430 = sshll.u32 %s422, 4
          %s431 = int_to_ptr.vmem [resolvable:$true] %s430
          %433 = dma.hbm_to_vmem [thread:$0]  %s420, 16, %s431, %s338
          %s434 = sadd.s32 %s328, 5
          %s435 = sld [smem:[#allocation5 + %s434]]
          %p436 = scmp.gt.s32.totalorder %s435, 0
          %s437 = scalar_select %p436, %s435, 0
          %p438 = scmp.lt.s32.totalorder %s437, 63
          %s439 = scalar_select %p438, %s437, 63
          %s440 = smul.addr %s439, 16
          %s441 = scalar_lea.hbm %s2, %s440
          %s442 = sadd.s32 5, %s336
          %s443 = scalar_lea.vmem [#allocation2], %s442
          // Predicated region
          $region89: #{tpu_custom_call.1} parent=67 // pred_check
            _
          $region90: #{tpu_custom_call.1} parent=67 // pred_check_branch
            %445 = sbr.rel target = $region92
          $region91: #{tpu_custom_call.1} parent=67 // pred_region
            %446 = sst [smem:[#allocation12]] [#allocation39]
            %447 = sst [smem:[#allocation13]] [#allocation38]
          $region92: #{tpu_custom_call.1} parent=67 // pred_fallthru
            _
          %449 = shalt.err (0)
          %s451 = sshll.u32 %s443, 4
          %s452 = int_to_ptr.vmem [resolvable:$true] %s451
          %454 = dma.hbm_to_vmem [thread:$0]  %s441, 16, %s452, %s338
          %s455 = sadd.s32 %s328, 6
          %s456 = sld [smem:[#allocation5 + %s455]]
          %p457 = scmp.gt.s32.totalorder %s456, 0
          %s458 = scalar_select %p457, %s456, 0
          %p459 = scmp.lt.s32.totalorder %s458, 63
          %s460 = scalar_select %p459, %s458, 63
          %s461 = smul.addr %s460, 16
          %s462 = scalar_lea.hbm %s2, %s461
          %s463 = sadd.s32 6, %s336
          %s464 = scalar_lea.vmem [#allocation2], %s463
          // Predicated region
          $region93: #{tpu_custom_call.1} parent=67 // pred_check
            _
          $region94: #{tpu_custom_call.1} parent=67 // pred_check_branch
            %466 = sbr.rel target = $region96
          $region95: #{tpu_custom_call.1} parent=67 // pred_region
            %467 = sst [smem:[#allocation12]] [#allocation41]
            %468 = sst [smem:[#allocation13]] [#allocation40]
          $region96: #{tpu_custom_call.1} parent=67 // pred_fallthru
            _
          %470 = shalt.err (0)
          %s472 = sshll.u32 %s464, 4
          %s473 = int_to_ptr.vmem [resolvable:$true] %s472
          %475 = dma.hbm_to_vmem [thread:$0]  %s462, 16, %s473, %s338
          %s476 = sadd.s32 %s328, 7
          %s477 = sld [smem:[#allocation5 + %s476]]
          %p478 = scmp.gt.s32.totalorder %s477, 0
          %s479 = scalar_select %p478, %s477, 0
          %p480 = scmp.lt.s32.totalorder %s479, 63
          %s481 = scalar_select %p480, %s479, 63
          %s482 = smul.addr %s481, 16
          %s483 = scalar_lea.hbm %s2, %s482
          %s484 = sadd.s32 7, %s336
          %s485 = scalar_lea.vmem [#allocation2], %s484
          // Predicated region
          $region97: #{tpu_custom_call.1} parent=67 // pred_check
            _
          $region98: #{tpu_custom_call.1} parent=67 // pred_check_branch
            %487 = sbr.rel target = $region100
          $region99: #{tpu_custom_call.1} parent=67 // pred_region
            %488 = sst [smem:[#allocation12]] [#allocation43]
            %489 = sst [smem:[#allocation13]] [#allocation42]
          $region100: #{tpu_custom_call.1} parent=67 // pred_fallthru
            _
          %491 = shalt.err (0)
          %s493 = sshll.u32 %s485, 4
          %s494 = int_to_ptr.vmem [resolvable:$true] %s493
          %496 = dma.hbm_to_vmem [thread:$0]  %s483, 16, %s494, %s338
        $region68: #{tpu_custom_call.1} parent=23 // pred_fallthru
          _
        %s497 = smul.u32 %s147, 8
        %s498 = scalar_lea.vmem [#allocation2], %s497
        %s499 = scalar_lea.sflag [#allocation3], %s147
        %s500 = smul.u32 8, 1
        %s501 = sshll.u32 %s500, 4
        %502 = dma.done %s499, %s501
        %p503 = scmp.lt.s32.totalorder %s135, 0
        %s504 = ssub.s32 0, %s135
        %s505 = scalar_select %p503, %s504, %s135
        %s506 = sand.u32 %s505, 3
        %s507 = ssub.s32 0, %s506
        %s508 = scalar_select %p503, %s507, %s506
        %p509 = scmp.ne.s32.totalorder %s508, 0
        %p510 = scmp.lt.s32.totalorder %s508, 0
        %p511 = pnand %p510, %p509
        %p512 = pneg %p511
        %s513 = sadd.s32 %s508, 4
        %s514 = scalar_select %p512, %s513, %s508
        %s515 = smul.u32 %s514, 8
        %v516 = vld [vmem:[%s498] sm:$0xff]
        %s517 = scalar_lea.vmem [#allocation6], %s515
        %v518 = vld [vmem:[%s517] sm:$0xff]
        %v519 = vadd.f32 %v516, %v518
        %520 = vst [vmem:[%s131] sm:$0xff] %v519
        %s521 = sand.u32 %s67, 1
        %s522 = scalar_lea.sflag [#allocation8], %s521
        %s523 = sand.u32 %s67, 1
        %s524 = smul.addr %s523, 8
        %s525 = scalar_lea.vmem [#allocation9], %s524
        // Predicated region
        $region101: #{tpu_custom_call.1} parent=23 // pred_check
          %p526 = pneg %p77
        $region102: #{tpu_custom_call.1} parent=23 // pred_check_branch
          %528 = sbr.rel (%p526) target = $region104
        $region103: #{tpu_custom_call.1} parent=23 // pred_region
          %s529 = smul.u32 %s26, 4
          %s530 = sadd.s32 %s529, %s27
          %s532 = ssub.s32 128, 128
          %533 = vsyncadd %s522, %s532
          %s534 = smul.addr %s530, 128
          %s535 = scalar_lea.hbm %s3, %s534
          %s537 = sshll.u32 %s525, 4
          %s538 = int_to_ptr.vmem [resolvable:$true] %s537
          %540 = dma.vmem_to_hbm [thread:$0]  %s538, 128, %s535, %s522
        $region104: #{tpu_custom_call.1} parent=23 // pred_fallthru
          _
      $region24: #{tpu_custom_call.1} parent=5 // pred_fallthru
        _
      %p541 = scmp.le.s32.totalorder 2, %s17
      // Predicated region
      $region105: #{tpu_custom_call.1} parent=5 // pred_check
        %p542 = pneg %p541
      $region106: #{tpu_custom_call.1} parent=5 // pred_check_branch
        %544 = sbr.rel (%p542) target = $region108
      $region107: #{tpu_custom_call.1} parent=5 // pred_region
        %s545 = ssub.s32 %s17, 2
        // Predicated region
        $region109: #{tpu_custom_call.1} parent=107 // pred_check
          %p546 = pneg %p83
        $region110: #{tpu_custom_call.1} parent=107 // pred_check_branch
          %548 = sbr.rel (%p546) target = $region112
        $region111: #{tpu_custom_call.1} parent=107 // pred_region
          %s549 = sand.u32 %s68, 1
          %s550 = scalar_lea.sflag [#allocation8], %s549
          %s551 = sand.u32 %s68, 1
          %s552 = smul.addr %s551, 8
          %s553 = scalar_lea.vmem [#allocation9], %s552
          %554 = dma.done %s550, 128
        $region112: #{tpu_custom_call.1} parent=107 // pred_fallthru
          _
      $region108: #{tpu_custom_call.1} parent=5 // pred_fallthru
        _
    $region6: #{tpu_custom_call.1} parent=1 // loop_footer
      %s21 = sadd.s32 1, %s17
    $region7: #{tpu_custom_call.1} parent=1 // loop_footer_branch
      %16 = sbr.rel target = $region3
    $region8: #{tpu_custom_call.1} parent=1 // loop_exit
      _
    %555 = vsyncpa [#allocation7], 1
    %s556 = scalar_lea.sflag [#allocation7], 1
    %557 = vsyncpa %s556, 1
    %558 = vsyncpa [#allocation8], 1
    %s559 = scalar_lea.sflag [#allocation8], 1
    %560 = vsyncpa %s559, 1
  %561 = vsyncmov [#allocation3]
  %s562 = vpop.sfrf %561
  %p563 = scmp.eq.s32.totalorder %s562, 0
  %p564 = pneg %p563
  %566 = shalt.err (%p564)
  %s567 = scalar_lea.sflag [#allocation3], 1
  %568 = vsyncmov %s567
  %s569 = vpop.sfrf %568
  %p570 = scmp.eq.s32.totalorder %s569, 0
  %p571 = pneg %p570
  %573 = shalt.err (%p571)

</llo_original>
